<compile_context>
chip_gen: v7x
topology: tpu7x:2x2x1
jax: 0.10.0
libtpu: 0.0.40
codegen_flags: <defaults>
</compile_context>

<pallas_src>
import jax
import jax.numpy as jnp
from jax import lax
from jax.experimental import pallas as pl
from jax.experimental.pallas import tpu as pltpu

# --- config (cfg.UPDATE.IN_DIM, cfg.CLASSIFY.FC_DIMS, cfg.CLASSIFY.INF_THRESH) ---
IN_DIM = 32
FC_DIMS = (64, 32)
DROPOUT_P = 0.1          # unused at eval
INF_THRESH = 0.5
LN_EPS = 1e-5

MAX_SINGLE_STEP_ROWS = 4096   # up to here: one grid step, block = full array
FALLBACK_TM = 2048            # beyond: tile rows (multiple of 8 & 128), ragged tail


def node_cls_head_kernel(x_ref, w_ref, v_ref, logits_ref):
    fc0, fc1 = FC_DIMS

    # Node features in native dtype (bf16 or f32); compute in f32 everywhere
    # (required on v5e, harmless elsewhere).
    x = x_ref[...].astype(jnp.float32)          # (tm, IN_DIM)

    # Unpack the two parameter slabs (static slices of tiny VMEM-resident tiles).
    wslab = w_ref[...]                           # (IN_DIM + fc0, fc0)
    vslab = v_ref[...]                           # (8, fc0)
    w1 = wslab[:IN_DIM, :]                       # (IN_DIM, fc0)
    w2 = wslab[IN_DIM:, :fc1]                    # (fc0, fc1)
    b1, g1, be1 = vslab[0:1, :], vslab[1:2, :], vslab[2:3, :]
    b2, g2, be2 = vslab[3:4, :fc1], vslab[4:5, :fc1], vslab[5:6, :fc1]
    w3t = vslab[6:7, :fc1]                       # (1, fc1)
    b3 = vslab[7:8, 0:1]                         # (1, 1)

    def block(h, w, b, g, be):
        # Linear -> LayerNorm -> ReLU -> Dropout(identity, eval mode)
        h = jnp.dot(h, w, preferred_element_type=jnp.float32) + b
        mu = jnp.mean(h, axis=-1, keepdims=True)
        var = jnp.mean((h - mu) * (h - mu), axis=-1, keepdims=True)
        h = (h - mu) * lax.rsqrt(var + LN_EPS) * g + be
        return jnp.maximum(h, 0.0)

    h = block(x, w1, b1, g1, be1)               # (tm, fc0)
    h = block(h, w2, b2, g2, be2)               # (tm, fc1)

    # Final Linear(fc1, 1) computed lane-dense: (1, fc1) x (tm, fc1)^T -> (1, tm).
    z = lax.dot_general(w3t, h, (((1,), (1,)), ((), ())),
                        preferred_element_type=jnp.float32) + b3
    logits_ref[...] = z.astype(logits_ref.dtype)


def init_params(key):
    ks = jax.random.split(key, 6)
    w1 = jax.random.normal(ks[0], (IN_DIM, FC_DIMS[0]), jnp.float32) * 0.05
    b1 = jax.random.normal(ks[1], (1, FC_DIMS[0]), jnp.float32) * 0.05
    g1 = jnp.ones((1, FC_DIMS[0]), jnp.float32)
    be1 = jnp.zeros((1, FC_DIMS[0]), jnp.float32)
    w2 = jax.random.normal(ks[2], (FC_DIMS[0], FC_DIMS[1]), jnp.float32) * 0.05
    b2 = jax.random.normal(ks[3], (1, FC_DIMS[1]), jnp.float32) * 0.05
    g2 = jnp.ones((1, FC_DIMS[1]), jnp.float32)
    be2 = jnp.zeros((1, FC_DIMS[1]), jnp.float32)
    # Linear(fc1, 1) weight stored in row form (1, fc1) for the lane-dense projection.
    w3t = jax.random.normal(ks[4], (1, FC_DIMS[1]), jnp.float32) * 0.05
    b3 = jax.random.normal(ks[5], (1, 1), jnp.float32) * 0.05
    return [w1, b1, g1, be1, w2, b2, g2, be2, w3t, b3]


def pack_params(params):
    """Pack the 10 parameter tensors into 2 slabs (do this once, outside the hot path)."""
    w1, b1, g1, be1, w2, b2, g2, be2, w3t, b3 = params
    fc0, fc1 = FC_DIMS
    w2p = jnp.zeros((fc0, fc0), jnp.float32).at[:, :fc1].set(w2)
    wslab = jnp.concatenate([w1, w2p], axis=0)               # (IN_DIM + fc0, fc0)

    def pad_row(v):
        return jnp.zeros((1, fc0), jnp.float32).at[:, :v.shape[1]].set(v)

    vslab = jnp.concatenate([pad_row(b1), pad_row(g1), pad_row(be1),
                             pad_row(b2), pad_row(g2), pad_row(be2),
                             pad_row(w3t), pad_row(b3)], axis=0)  # (8, fc0)
    return wslab, vslab


def node_cls_logits(node_feats, wslab, vslab):
    """Run the MLP head; returns logits of shape (N, 1)."""
    N, D = node_feats.shape
    assert D == IN_DIM
    fc0, fc1 = FC_DIMS

    if N <= MAX_SINGLE_STEP_ROWS:
        # Single grid step; block == full array, so no padding copy is needed and
        # any N (not a multiple of 8/128) is a legal block shape.
        tm = N
    else:
        # Large N: row tiles of 2048 (multiple of 8 and 128).  The last block may
        # be ragged: OOB reads are garbage, OOB writes are masked; garbage lanes
        # are sliced off by [:N] below before any reduction.
        tm = FALLBACK_TM
    grid = (pl.cdiv(N, tm),)

    flops = 2 * N * (IN_DIM * fc0 + fc0 * fc1 + fc1)
    bytes_accessed = (N * D * node_feats.dtype.itemsize + N * 4
                      + wslab.size * 4 + vslab.size * 4)

    logits_row = pl.pallas_call(
        node_cls_head_kernel,
        out_shape=jax.ShapeDtypeStruct((1, N), jnp.float32),
        grid=grid,
        in_specs=[pl.BlockSpec((tm, D), lambda i: (i, 0)),
                  pl.BlockSpec(wslab.shape, lambda i: (0, 0)),
                  pl.BlockSpec(vslab.shape, lambda i: (0, 0))],
        out_specs=pl.BlockSpec((1, tm), lambda i: (0, i)),
        # No resident accumulator -> row axis is independent.  (On v7x with very
        # large N, pltpu.CORE_PARALLEL here can shard rows across both TCs.)
        compiler_params=pltpu.CompilerParams(dimension_semantics=("parallel",)),
        cost_estimate=pl.CostEstimate(flops=flops, transcendentals=2 * N,
                                      bytes_accessed=bytes_accessed),
    )(node_feats, wslab, vslab)

    return logits_row[0, :N].reshape(N, 1)


def node_cls_head_forward(node_feats_list, gt_ids, wslab, vslab):
    """Returns (node_cls_loss, pred_logits)."""
    pred_logits = node_cls_logits(node_feats_list[-1], wslab, vslab)
    gt_labels = (gt_ids != 0).reshape(-1, 1).astype(jnp.float32)
    z = pred_logits
    # Stable BCE-with-logits, mean reduction (trivial elementwise; XLA fuses it
    # into the slice of the kernel output).
    node_cls_loss = jnp.mean(jnp.maximum(z, 0.0) - z * gt_labels
                             + jnp.log1p(jnp.exp(-jnp.abs(z))))
    return node_cls_loss, pred_logits


def node_cls_head_inference(node_feats, wslab, vslab):
    # sigmoid(logits).squeeze(1) >= inf_thresh; no wasted BCE work/DMA.
    logits = node_cls_logits(node_feats, wslab, vslab)
    return jax.nn.sigmoid(logits[:, 0]) >= INF_THRESH


def reference_forward(node_feats, gt_ids, params):
    (w1, b1, g1, be1, w2, b2, g2, be2, w3t, b3) = params
    y = (gt_ids != 0).reshape(-1, 1).astype(jnp.float32)

    def ln(h, g, be):
        mu = h.mean(-1, keepdims=True)
        var = ((h - mu) ** 2).mean(-1, keepdims=True)
        return (h - mu) / jnp.sqrt(var + LN_EPS) * g + be

    h = jnp.maximum(ln(node_feats @ w1 + b1, g1, be1), 0.0)
    h = jnp.maximum(ln(h @ w2 + b2, g2, be2), 0.0)
    z = h @ w3t.T + b3
    loss = jnp.mean(jnp.maximum(z, 0.0) - z * y + jnp.log1p(jnp.exp(-jnp.abs(z))))
    return loss, z


if __name__ == "__main__":
    key = jax.random.PRNGKey(0)
    kp, kx1, kg1, kx2, kg2 = jax.random.split(key, 5)
    params = init_params(kp)
    wslab, vslab = pack_params(params)   # packed once, reused by every call

    # Case 1: small (2 images x 8 topk dets) -> single grid step, no padding.
    n_img, topk = 2, 8
    N1 = n_img * topk
    feats1 = jax.random.normal(kx1, (N1, IN_DIM), jnp.float32)
    gt1 = jax.random.randint(kg1, (n_img, topk), 0, 3)      # zeros => negative nodes
    loss1, logits1 = jax.block_until_ready(
        node_cls_head_forward([feats1], gt1, wslab, vslab))
    ref_loss1, ref_logits1 = reference_forward(feats1, gt1, params)
    assert jnp.allclose(logits1, ref_logits1, atol=1e-4, rtol=1e-4)
    assert jnp.allclose(loss1, ref_loss1, atol=1e-4, rtol=1e-4)

    # Case 2: 3 images x 150 topk dets = 450 nodes -> still one grid step, no padding.
    n_img, topk = 3, 150
    N2 = n_img * topk
    feats2 = jax.random.normal(kx2, (N2, IN_DIM), jnp.float32)
    gt2 = jax.random.randint(kg2, (n_img, topk), 0, 3)
    loss2, logits2 = jax.block_until_ready(
        node_cls_head_forward([feats2], gt2, wslab, vslab))
    ref_loss2, ref_logits2 = reference_forward(feats2, gt2, params)
    assert jnp.allclose(logits2, ref_logits2, atol=1e-4, rtol=1e-4)
    assert jnp.allclose(loss2, ref_loss2, atol=1e-4, rtol=1e-4)

    # Inference path (same kernel, no BCE work).
    pos_mask = jax.block_until_ready(node_cls_head_inference(feats1, wslab, vslab))
    assert pos_mask.shape == (N1,) and pos_mask.dtype == jnp.bool_

    print("KERNEL_OK")
</pallas_src>

<mosaic_0001>
module attributes {stable_mosaic.version = 11 : i64} {
  func.func @node_cls_head_kernel(%arg0: i32, %arg1: memref<16x32xf32, #tpu.memory_space<vmem>>, %arg2: memref<96x64xf32, #tpu.memory_space<vmem>>, %arg3: memref<8x64xf32, #tpu.memory_space<vmem>>, %arg4: memref<1x16xf32, #tpu.memory_space<vmem>>) attributes {dimension_semantics = [#tpu.dimension_semantics<parallel>], iteration_bounds = array<i64: 1>, scalar_prefetch = 0 : i64, scratch_operands = 0 : i64, tpu.core_type = #tpu.core_type<tc>, window_params = [{transform_indices = @transform_0, window_bounds = array<i64: 16, 32>}, {pipeline_mode = #tpu.pipeline_mode<synchronous>, transform_indices = @transform_1, window_bounds = array<i64: 96, 64>}, {pipeline_mode = #tpu.pipeline_mode<synchronous>, transform_indices = @transform_2, window_bounds = array<i64: 8, 64>}, {transform_indices = @transform_3, window_bounds = array<i64: 1, 16>}]} {
    %c0 = arith.constant 0 : index
    %c0_0 = arith.constant 0 : index
    %0 = vector.load %arg1[%c0, %c0_0] : memref<16x32xf32, #tpu.memory_space<vmem>>, vector<16x32xf32>
    %c0_1 = arith.constant 0 : index
    %c0_2 = arith.constant 0 : index
    %1 = vector.load %arg2[%c0_1, %c0_2] : memref<96x64xf32, #tpu.memory_space<vmem>>, vector<96x64xf32>
    %c0_3 = arith.constant 0 : index
    %c0_4 = arith.constant 0 : index
    %2 = vector.load %arg3[%c0_3, %c0_4] : memref<8x64xf32, #tpu.memory_space<vmem>>, vector<8x64xf32>
    %3 = vector.extract_strided_slice %1 {offsets = [0, 0], sizes = [32, 64], strides = [1, 1]} : vector<96x64xf32> to vector<32x64xf32>
    %4 = vector.extract_strided_slice %1 {offsets = [32, 0], sizes = [64, 32], strides = [1, 1]} : vector<96x64xf32> to vector<64x32xf32>
    %5 = vector.extract_strided_slice %2 {offsets = [0, 0], sizes = [1, 64], strides = [1, 1]} : vector<8x64xf32> to vector<1x64xf32>
    %6 = vector.extract_strided_slice %2 {offsets = [1, 0], sizes = [1, 64], strides = [1, 1]} : vector<8x64xf32> to vector<1x64xf32>
    %7 = vector.extract_strided_slice %2 {offsets = [2, 0], sizes = [1, 64], strides = [1, 1]} : vector<8x64xf32> to vector<1x64xf32>
    %8 = vector.extract_strided_slice %2 {offsets = [3, 0], sizes = [1, 32], strides = [1, 1]} : vector<8x64xf32> to vector<1x32xf32>
    %9 = vector.extract_strided_slice %2 {offsets = [4, 0], sizes = [1, 32], strides = [1, 1]} : vector<8x64xf32> to vector<1x32xf32>
    %10 = vector.extract_strided_slice %2 {offsets = [5, 0], sizes = [1, 32], strides = [1, 1]} : vector<8x64xf32> to vector<1x32xf32>
    %11 = vector.extract_strided_slice %2 {offsets = [6, 0], sizes = [1, 32], strides = [1, 1]} : vector<8x64xf32> to vector<1x32xf32>
    %12 = vector.extract_strided_slice %2 {offsets = [7, 0], sizes = [1, 1], strides = [1, 1]} : vector<8x64xf32> to vector<1x1xf32>
    %cst = arith.constant dense<0.000000e+00> : vector<16x64xf32>
    %13 = tpu.matmul %0, %3, %cst {dimension_numbers = #tpu.dot_dimension_numbers<[1], [0], [0], [1], [0, 0, 1, 1], [], []>} : vector<16x32xf32>, vector<32x64xf32>, vector<16x64xf32> -> vector<16x64xf32>
    %14 = vector.broadcast %5 : vector<1x64xf32> to vector<16x64xf32>
    %15 = arith.addf %13, %14 : vector<16x64xf32>
    %cst_5 = arith.constant dense<0.000000e+00> : vector<16xf32>
    %16 = vector.multi_reduction <add>, %15, %cst_5 [1] : vector<16x64xf32> to vector<16xf32>
    %17 = vector.shape_cast %16 : vector<16xf32> to vector<16x1xf32>
    %cst_6 = arith.constant 6.400000e+01 : f32
    %18 = vector.broadcast %cst_6 : f32 to vector<16x1xf32>
    %19 = arith.divf %17, %18 : vector<16x1xf32>
    %20 = vector.broadcast %19 : vector<16x1xf32> to vector<16x64xf32>
    %21 = arith.subf %15, %20 : vector<16x64xf32>
    %22 = vector.broadcast %19 : vector<16x1xf32> to vector<16x64xf32>
    %23 = arith.subf %15, %22 : vector<16x64xf32>
    %24 = arith.mulf %21, %23 : vector<16x64xf32>
    %cst_7 = arith.constant dense<0.000000e+00> : vector<16xf32>
    %25 = vector.multi_reduction <add>, %24, %cst_7 [1] : vector<16x64xf32> to vector<16xf32>
    %26 = vector.shape_cast %25 : vector<16xf32> to vector<16x1xf32>
    %cst_8 = arith.constant 6.400000e+01 : f32
    %27 = vector.broadcast %cst_8 : f32 to vector<16x1xf32>
    %28 = arith.divf %26, %27 : vector<16x1xf32>
    %29 = vector.broadcast %19 : vector<16x1xf32> to vector<16x64xf32>
    %30 = arith.subf %15, %29 : vector<16x64xf32>
    %cst_9 = arith.constant 9.99999974E-6 : f32
    %31 = vector.broadcast %cst_9 : f32 to vector<16x1xf32>
    %32 = arith.addf %28, %31 : vector<16x1xf32>
    %33 = math.rsqrt %32 : vector<16x1xf32>
    %34 = vector.broadcast %33 : vector<16x1xf32> to vector<16x64xf32>
    %35 = arith.mulf %30, %34 : vector<16x64xf32>
    %36 = vector.broadcast %6 : vector<1x64xf32> to vector<16x64xf32>
    %37 = arith.mulf %35, %36 : vector<16x64xf32>
    %38 = vector.broadcast %7 : vector<1x64xf32> to vector<16x64xf32>
    %39 = arith.addf %37, %38 : vector<16x64xf32>
    %cst_10 = arith.constant 0.000000e+00 : f32
    %40 = vector.broadcast %cst_10 : f32 to vector<16x64xf32>
    %41 = arith.maximumf %39, %40 : vector<16x64xf32>
    %cst_11 = arith.constant dense<0.000000e+00> : vector<16x32xf32>
    %42 = tpu.matmul %41, %4, %cst_11 {dimension_numbers = #tpu.dot_dimension_numbers<[1], [0], [0], [1], [0, 0, 1, 1], [], []>} : vector<16x64xf32>, vector<64x32xf32>, vector<16x32xf32> -> vector<16x32xf32>
    %43 = vector.broadcast %8 : vector<1x32xf32> to vector<16x32xf32>
    %44 = arith.addf %42, %43 : vector<16x32xf32>
    %cst_12 = arith.constant dense<0.000000e+00> : vector<16xf32>
    %45 = vector.multi_reduction <add>, %44, %cst_12 [1] : vector<16x32xf32> to vector<16xf32>
    %46 = vector.shape_cast %45 : vector<16xf32> to vector<16x1xf32>
    %cst_13 = arith.constant 3.200000e+01 : f32
    %47 = vector.broadcast %cst_13 : f32 to vector<16x1xf32>
    %48 = arith.divf %46, %47 : vector<16x1xf32>
    %49 = vector.broadcast %48 : vector<16x1xf32> to vector<16x32xf32>
    %50 = arith.subf %44, %49 : vector<16x32xf32>
    %51 = vector.broadcast %48 : vector<16x1xf32> to vector<16x32xf32>
    %52 = arith.subf %44, %51 : vector<16x32xf32>
    %53 = arith.mulf %50, %52 : vector<16x32xf32>
    %cst_14 = arith.constant dense<0.000000e+00> : vector<16xf32>
    %54 = vector.multi_reduction <add>, %53, %cst_14 [1] : vector<16x32xf32> to vector<16xf32>
    %55 = vector.shape_cast %54 : vector<16xf32> to vector<16x1xf32>
    %cst_15 = arith.constant 3.200000e+01 : f32
    %56 = vector.broadcast %cst_15 : f32 to vector<16x1xf32>
    %57 = arith.divf %55, %56 : vector<16x1xf32>
    %58 = vector.broadcast %48 : vector<16x1xf32> to vector<16x32xf32>
    %59 = arith.subf %44, %58 : vector<16x32xf32>
    %cst_16 = arith.constant 9.99999974E-6 : f32
    %60 = vector.broadcast %cst_16 : f32 to vector<16x1xf32>
    %61 = arith.addf %57, %60 : vector<16x1xf32>
    %62 = math.rsqrt %61 : vector<16x1xf32>
    %63 = vector.broadcast %62 : vector<16x1xf32> to vector<16x32xf32>
    %64 = arith.mulf %59, %63 : vector<16x32xf32>
    %65 = vector.broadcast %9 : vector<1x32xf32> to vector<16x32xf32>
    %66 = arith.mulf %64, %65 : vector<16x32xf32>
    %67 = vector.broadcast %10 : vector<1x32xf32> to vector<16x32xf32>
    %68 = arith.addf %66, %67 : vector<16x32xf32>
    %cst_17 = arith.constant 0.000000e+00 : f32
    %69 = vector.broadcast %cst_17 : f32 to vector<16x32xf32>
    %70 = arith.maximumf %68, %69 : vector<16x32xf32>
    %cst_18 = arith.constant dense<0.000000e+00> : vector<1x16xf32>
    %71 = tpu.matmul %11, %70, %cst_18 {dimension_numbers = #tpu.dot_dimension_numbers<[1], [1], [0], [0], [0, 0, 1, 0], [], []>} : vector<1x32xf32>, vector<16x32xf32>, vector<1x16xf32> -> vector<1x16xf32>
    %72 = vector.broadcast %12 : vector<1x1xf32> to vector<1x16xf32>
    %73 = arith.addf %71, %72 : vector<1x16xf32>
    %c0_19 = arith.constant 0 : index
    %c0_20 = arith.constant 0 : index
    %74 = vector.load %arg4[%c0_19, %c0_20] : memref<1x16xf32, #tpu.memory_space<vmem>>, vector<1x16xf32>
    tpu.vector_store %arg4[%c0_19, %c0_20], %73 {strides = array<i32>} : memref<1x16xf32, #tpu.memory_space<vmem>>, vector<1x16xf32>,
    return
  }
  func.func @transform_0(%arg0: i32) -> (i32, i32) {
    %c0_i32 = arith.constant 0 : i32
    %c0_i32_0 = arith.constant 0 : i32
    return %arg0, %c0_i32 : i32, i32
  }
  func.func @transform_1(%arg0: i32) -> (i32, i32) {
    %c0_i32 = arith.constant 0 : i32
    %c0_i32_0 = arith.constant 0 : i32
    %c0_i32_1 = arith.constant 0 : i32
    return %c0_i32, %c0_i32_0 : i32, i32
  }
  func.func @transform_2(%arg0: i32) -> (i32, i32) {
    %c0_i32 = arith.constant 0 : i32
    %c0_i32_0 = arith.constant 0 : i32
    %c0_i32_1 = arith.constant 0 : i32
    return %c0_i32, %c0_i32_0 : i32, i32
  }
  func.func @transform_3(%arg0: i32) -> (i32, i32) {
    %c0_i32 = arith.constant 0 : i32
    %c0_i32_0 = arith.constant 0 : i32
    return %c0_i32, %arg0 : i32, i32
  }
}

</mosaic_0001>

<llo_original>
// kernel: tpu_custom_call.1
$region0: #{tpu_custom_call.1}
  #allocation0 [shape = 'u32[]', space=smem, size = 0x4, offset = 0x4, fixed_abs, tag = 'smem constant byte address 0x4 - core index']
  #allocation1 [shape = 'u32[144,128]{1,0:T(1,128)}', space=vmem, size = 0x12000, scoped, tag = 'internal scratch']
  %s0 = inlined_call_operand.vmem [shape: f32[16,32], index: 0, kind: input, shape index: {}]
  %s1 = inlined_call_operand.vmem [shape: f32[96,64], index: 1, kind: input, shape index: {}]
  %s2 = inlined_call_operand.vmem [shape: f32[8,64], index: 2, kind: input, shape index: {}]
  %s3 = inlined_call_operand.hbm [shape: f32[1,16], index: 3, kind: output, shape index: {}]
  %s4 = sld [smem:[#allocation0]]
  $region22: #{tpu_custom_call.1} parent=0
    _
  %s6 = ssub.s32 1, %s4
  %s7 = scalar_select 0, %s6, %s4
  $region1: #{tpu_custom_call.1} parent=0
    #allocation2 [shape = 'u8[512]{0}', space=vmem, size = 0x400, scoped, tag = 'output window, operand 0, single buffered']
    #allocation3 [shape = 's32[1]{0}', space=sflag, size = 0x4, scoped, tag = 'scoped memory for tpu_custom_call.1']
    %8 = vsyncpa [#allocation3], 0
    // Predicated region
    $region2: #{tpu_custom_call.1} parent=1 // pred_check
      _
    $region3: #{tpu_custom_call.1} parent=1 // pred_check_branch
      %10 = sbr.rel (0) target = $region5
    $region4: #{tpu_custom_call.1} parent=1 // pred_region
      _
    $region5: #{tpu_custom_call.1} parent=1 // pred_fallthru
      _
    // Predicated region
    $region6: #{tpu_custom_call.1} parent=1 // pred_check
      _
    $region7: #{tpu_custom_call.1} parent=1 // pred_check_branch
      %12 = sbr.rel (0) target = $region9
    $region8: #{tpu_custom_call.1} parent=1 // pred_region
      _
    $region9: #{tpu_custom_call.1} parent=1 // pred_fallthru
      _
    // Predicated region
    $region10: #{tpu_custom_call.1} parent=1 // pred_check
      _
    $region11: #{tpu_custom_call.1} parent=1 // pred_check_branch
      %14 = sbr.rel (0) target = $region13
    $region12: #{tpu_custom_call.1} parent=1 // pred_region
      _
    $region13: #{tpu_custom_call.1} parent=1 // pred_fallthru
      _
    %v15 = vld [vmem:[%s0] sm:$0xff]
    %v16 = vld [vmem:[%s0 + $0x8] sm:$0xff]
    %v17 = vld [vmem:[%s1] sm:$0xff]
    %v18 = vld [vmem:[%s1 + $0x8] sm:$0xff]
    %v19 = vld [vmem:[%s1 + $0x10] sm:$0xff]
    %v20 = vld [vmem:[%s1 + $0x18] sm:$0xff]
    %v21 = vld [vmem:[%s1 + $0x20] sm:$0xff]
    %v22 = vld [vmem:[%s1 + $0x28] sm:$0xff]
    %v23 = vld [vmem:[%s1 + $0x30] sm:$0xff]
    %v24 = vld [vmem:[%s1 + $0x38] sm:$0xff]
    %v25 = vld [vmem:[%s1 + $0x40] sm:$0xff]
    %v26 = vld [vmem:[%s1 + $0x48] sm:$0xff]
    %v27 = vld [vmem:[%s1 + $0x50] sm:$0xff]
    %v28 = vld [vmem:[%s1 + $0x58] sm:$0xff]
    %v29 = vld [vmem:[%s2] sm:$0xff]
    %v30 = vlaneseq
    %v31 = vshrl.u32 %v30, 7
    %v32 = vsub.s32 0, %v31
    %v33 = vrot.slane %v29, %v32
    %vm34 = vcmask 261120
    %v36 = vsel %vm34, %v15, 0
    %v39 = vsel %vm34, %v16, 0
    %41 = vmatprep.subr.mxu0 0.0
    %42 = vmatpush1.msra.mxu0 %v17
    %43 = vmatprep.subr.mxu0 0.0
    %44 = vmatpush1.msra.mxu0 %v18
    %45 = vmatprep.subr.mxu0 0.0
    %46 = vmatpush1.msra.mxu0 %v19
    %47 = vmatprep.subr.mxu0 0.0
    %48 = vmatpush1.msra.mxu0 %v20
    %49 = vmatprep.subr.mxu0 0.0
    %50 = vmatpush1.msra.mxu0 0.0
    %51 = vmatprep.subr.mxu0 0.0
    %52 = vmatpush1.msra.mxu0 0.0
    %53 = vmatprep.subr.mxu0 0.0
    %54 = vmatpush1.msra.mxu0 0.0
    %55 = vmatprep.subr.mxu0 0.0
    %56 = vmatpush1.msra.mxu0 0.0
    %57 = vmatprep.subr.mxu0 0.0
    %58 = vmatpush1.msra.mxu0 0.0
    %59 = vmatprep.subr.mxu0 0.0
    %60 = vmatpush1.msra.mxu0 0.0
    %61 = vmatprep.subr.mxu0 0.0
    %62 = vmatpush1.msra.mxu0 0.0
    %63 = vmatprep.subr.mxu0 0.0
    %64 = vmatpush1.msra.mxu0 0.0
    %65 = vmatprep.subr.mxu0 0.0
    %66 = vmatpush1.msra.mxu0 0.0
    %67 = vmatprep.subr.mxu0 0.0
    %68 = vmatpush1.msra.mxu0 0.0
    %69 = vmatprep.subr.mxu0 0.0
    %70 = vmatpush1.msra.mxu0 0.0
    %71 = vmatprep.subr.mxu0 0.0
    %72 = vmatpush1.msra.mxu0 0.0
    %73 = vmatprep.subr.mxu0 0.0
    %74 = vmatpush1.msra.mxu0 0.0
    %75 = vmatprep.subr.mxu0 0.0
    %76 = vmatpush1.msra.mxu0 0.0
    %77 = vmatprep.subr.mxu0 0.0
    %78 = vmatpush1.msra.mxu0 0.0
    %79 = vmatprep.subr.mxu0 0.0
    %80 = vmatpush1.msra.mxu0 0.0
    %81 = vmatprep.subr.mxu0 0.0
    %82 = vmatpush1.msra.mxu0 0.0
    %83 = vmatprep.subr.mxu0 0.0
    %84 = vmatpush1.msra.mxu0 0.0
    %85 = vmatprep.subr.mxu0 0.0
    %86 = vmatpush1.msra.mxu0 0.0
    %87 = vmatprep.subr.mxu0 0.0
    %88 = vmatpush1.msra.mxu0 0.0
    %89 = vmatprep.subr.mxu0 0.0
    %90 = vmatpush1.msra.mxu0 0.0
    %91 = vmatprep.subr.mxu0 0.0
    %92 = vmatpush1.msra.mxu0 0.0
    %93 = vmatprep.subr.mxu0 0.0
    %94 = vmatpush1.msra.mxu0 0.0
    %95 = vmatprep.subr.mxu0 0.0
    %96 = vmatpush1.msra.mxu0 0.0
    %97 = vmatprep.subr.mxu0 0.0
    %98 = vmatpush1.msra.mxu0 0.0
    %99 = vmatprep.subr.mxu0 0.0
    %100 = vmatpush1.msra.mxu0 0.0
    %101 = vmatprep.subr.mxu0 0.0
    %102 = vmatpush1.msra.mxu0 0.0
    %103 = vmatprep.subr.mxu0 0.0
    %104 = vmatpush1.msra.mxu0 0.0
    %105 = vmatprep.mubr.f32.mxu0 0.0
    %106 = vmatmul.mubr.f32.gmra.mrb[0].mxu0 %v36
    %v107 = vpop.f32.mrb[0].mxu0
    %v108 = vadd.f32 %v33, %v107
    %v109 = vpop.f32.mrb[0].mxu0
    %110 = vmatprep.mubr.f32.mxu0 0.0
    %111 = vmatmul.mubr.f32.gmra.mrb[0].mxu0 %v39
    %v112 = vpop.f32.mrb[0].mxu0
    %v113 = vadd.f32 %v33, %v112
    %v114 = vpop.f32.mrb[0].mxu0
    %115 = vdwg.mxu0
    %vm116 = vcmask 523264
    %v117 = vsel %vm116, %v108, 0.0
    %118 = vadd.xlane.f32.xlu0 %v117
    %v119 = vpop.xlane.xlu0 %118
    %v120 = vsel %vm116, %v113, 0.0
    %121 = vadd.xlane.f32.xlu0 %v120
    %v122 = vpop.xlane.xlu0 %121
    %v123 = vrcp.pop 64.0
    %v124 = vmul.f32 %v119, %v123
    %v125 = vmul.f32 %v122, %v123
    %v126 = vsub.f32 %v108, %v124
    %v127 = vsub.f32 %v113, %v125
    %v128 = vmul.f32 %v126, %v126
    %v129 = vmul.f32 %v127, %v127
    %v130 = vsel %vm116, %v128, 0.0
    %131 = vadd.xlane.f32.xlu0 %v130
    %v132 = vpop.xlane.xlu0 %131
    %v133 = vsel %vm116, %v129, 0.0
    %134 = vadd.xlane.f32.xlu0 %v133
    %v135 = vpop.xlane.xlu0 %134
    %v136 = vmul.f32 %v132, %v123
    %v137 = vmul.f32 %v135, %v123
    %v138 = vadd.f32 %v136, 1e-05
    %v139 = vadd.f32 %v137, 1e-05
    %v140 = vrsqrt.pop %v138
    %v141 = vrsqrt.pop %v139
    %v142 = vmul.f32 %v126, %v140
    %v143 = vmul.f32 %v127, %v141
    %v144 = vlaneseq
    %v145 = vshrl.u32 %v144, 7
    %v146 = vsub.s32 1, %v145
    %v147 = vrot.slane %v29, %v146
    %v148 = vmul.f32 %v142, %v147
    %v149 = vmul.f32 %v143, %v147
    %v150 = vlaneseq
    %v151 = vshrl.u32 %v150, 7
    %v152 = vsub.s32 2, %v151
    %v153 = vrot.slane %v29, %v152
    %v154 = vadd.f32 %v148, %v153
    %v155 = vadd.f32 %v149, %v153
    %v156 = vmax.f32 %v154, 0.0
    %v157 = vmax.f32 %v155, 0.0
    %v158 = vlaneseq
    %v159 = vshrl.u32 %v158, 7
    %v160 = vsub.s32 3, %v159
    %v161 = vrot.slane %v29, %v160
    %v163 = vsel %vm116, %v156, 0
    %v166 = vsel %vm116, %v157, 0
    %168 = vmatprep.subr.mxu0 0.0
    %169 = vmatpush1.msra.mxu0 %v21
    %170 = vmatprep.subr.mxu0 0.0
    %171 = vmatpush1.msra.mxu0 %v22
    %172 = vmatprep.subr.mxu0 0.0
    %173 = vmatpush1.msra.mxu0 %v23
    %174 = vmatprep.subr.mxu0 0.0
    %175 = vmatpush1.msra.mxu0 %v24
    %176 = vmatprep.subr.mxu0 0.0
    %177 = vmatpush1.msra.mxu0 %v25
    %178 = vmatprep.subr.mxu0 0.0
    %179 = vmatpush1.msra.mxu0 %v26
    %180 = vmatprep.subr.mxu0 0.0
    %181 = vmatpush1.msra.mxu0 %v27
    %182 = vmatprep.subr.mxu0 0.0
    %183 = vmatpush1.msra.mxu0 %v28
    %184 = vmatprep.subr.mxu0 0.0
    %185 = vmatpush1.msra.mxu0 0.0
    %186 = vmatprep.subr.mxu0 0.0
    %187 = vmatpush1.msra.mxu0 0.0
    %188 = vmatprep.subr.mxu0 0.0
    %189 = vmatpush1.msra.mxu0 0.0
    %190 = vmatprep.subr.mxu0 0.0
    %191 = vmatpush1.msra.mxu0 0.0
    %192 = vmatprep.subr.mxu0 0.0
    %193 = vmatpush1.msra.mxu0 0.0
    %194 = vmatprep.subr.mxu0 0.0
    %195 = vmatpush1.msra.mxu0 0.0
    %196 = vmatprep.subr.mxu0 0.0
    %197 = vmatpush1.msra.mxu0 0.0
    %198 = vmatprep.subr.mxu0 0.0
    %199 = vmatpush1.msra.mxu0 0.0
    %200 = vmatprep.subr.mxu0 0.0
    %201 = vmatpush1.msra.mxu0 0.0
    %202 = vmatprep.subr.mxu0 0.0
    %203 = vmatpush1.msra.mxu0 0.0
    %204 = vmatprep.subr.mxu0 0.0
    %205 = vmatpush1.msra.mxu0 0.0
    %206 = vmatprep.subr.mxu0 0.0
    %207 = vmatpush1.msra.mxu0 0.0
    %208 = vmatprep.subr.mxu0 0.0
    %209 = vmatpush1.msra.mxu0 0.0
    %210 = vmatprep.subr.mxu0 0.0
    %211 = vmatpush1.msra.mxu0 0.0
    %212 = vmatprep.subr.mxu0 0.0
    %213 = vmatpush1.msra.mxu0 0.0
    %214 = vmatprep.subr.mxu0 0.0
    %215 = vmatpush1.msra.mxu0 0.0
    %216 = vmatprep.subr.mxu0 0.0
    %217 = vmatpush1.msra.mxu0 0.0
    %218 = vmatprep.subr.mxu0 0.0
    %219 = vmatpush1.msra.mxu0 0.0
    %220 = vmatprep.subr.mxu0 0.0
    %221 = vmatpush1.msra.mxu0 0.0
    %222 = vmatprep.subr.mxu0 0.0
    %223 = vmatpush1.msra.mxu0 0.0
    %224 = vmatprep.subr.mxu0 0.0
    %225 = vmatpush1.msra.mxu0 0.0
    %226 = vmatprep.subr.mxu0 0.0
    %227 = vmatpush1.msra.mxu0 0.0
    %228 = vmatprep.subr.mxu0 0.0
    %229 = vmatpush1.msra.mxu0 0.0
    %230 = vmatprep.subr.mxu0 0.0
    %231 = vmatpush1.msra.mxu0 0.0
    %232 = vmatprep.mubr.f32.mxu0 0.0
    %233 = vmatmul.mubr.f32.gmra.mrb[0].mxu0 %v163
    %v234 = vpop.f32.mrb[0].mxu0
    %v235 = vadd.f32 %v161, %v234
    %v236 = vpop.f32.mrb[0].mxu0
    %237 = vmatprep.mubr.f32.mxu0 0.0
    %238 = vmatmul.mubr.f32.gmra.mrb[0].mxu0 %v166
    %v239 = vpop.f32.mrb[0].mxu0
    %v240 = vadd.f32 %v161, %v239
    %v241 = vpop.f32.mrb[0].mxu0
    %242 = vdwg.mxu0
    %v243 = vsel %vm34, %v235, 0.0
    %244 = vadd.xlane.f32.xlu0 %v243
    %v245 = vpop.xlane.xlu0 %244
    %v246 = vsel %vm34, %v240, 0.0
    %247 = vadd.xlane.f32.xlu0 %v246
    %v248 = vpop.xlane.xlu0 %247
    %v249 = vrcp.pop 32.0
    %v250 = vmul.f32 %v245, %v249
    %v251 = vmul.f32 %v248, %v249
    %v252 = vsub.f32 %v235, %v250
    %v253 = vsub.f32 %v240, %v251
    %v254 = vmul.f32 %v252, %v252
    %v255 = vmul.f32 %v253, %v253
    %v256 = vsel %vm34, %v254, 0.0
    %257 = vadd.xlane.f32.xlu0 %v256
    %v258 = vpop.xlane.xlu0 %257
    %v259 = vsel %vm34, %v255, 0.0
    %260 = vadd.xlane.f32.xlu0 %v259
    %v261 = vpop.xlane.xlu0 %260
    %v262 = vmul.f32 %v258, %v249
    %v263 = vmul.f32 %v261, %v249
    %v264 = vadd.f32 %v262, 1e-05
    %v265 = vadd.f32 %v263, 1e-05
    %v266 = vrsqrt.pop %v264
    %v267 = vrsqrt.pop %v265
    %v268 = vmul.f32 %v252, %v266
    %v269 = vmul.f32 %v253, %v267
    %v270 = vlaneseq
    %v271 = vshrl.u32 %v270, 7
    %v272 = vsub.s32 4, %v271
    %v273 = vrot.slane %v29, %v272
    %v274 = vmul.f32 %v268, %v273
    %v275 = vmul.f32 %v269, %v273
    %v276 = vlaneseq
    %v277 = vshrl.u32 %v276, 7
    %v278 = vsub.s32 5, %v277
    %v279 = vrot.slane %v29, %v278
    %v280 = vadd.f32 %v274, %v279
    %v281 = vadd.f32 %v275, %v279
    %v282 = vmax.f32 %v280, 0.0
    %v283 = vmax.f32 %v281, 0.0
    %285 = vset.pattern.permute.xlu0 0
    %286 = vperm.xlu0 %285, %v29
    %v287 = vpop.permute.xlu0 %286
    %v288 = vrot.slane %v29, 6
    %v289 = vrot.slane %v287, 7
    %v291 = vsel %vm34, %v288, 0
    %v294 = vsel %vm34, %v282, 0
    %v297 = vsel %vm34, %v283, 0
    %299 = vmatprep.subr.mxu0 0.0
    %300 = vmatpush1.xpose.msra.mxu0 %v294
    %301 = vmatprep.subr.mxu0 0.0
    %302 = vmatpush1.xpose.msra.mxu0 %v297
    %303 = vmatprep.subr.mxu0 0.0
    %304 = vmatpush1.xpose.msra.mxu0 0.0
    %305 = vmatprep.subr.mxu0 0.0
    %306 = vmatpush1.xpose.msra.mxu0 0.0
    %307 = vmatprep.subr.mxu0 0.0
    %308 = vmatpush1.xpose.msra.mxu0 0.0
    %309 = vmatprep.subr.mxu0 0.0
    %310 = vmatpush1.xpose.msra.mxu0 0.0
    %311 = vmatprep.subr.mxu0 0.0
    %312 = vmatpush1.xpose.msra.mxu0 0.0
    %313 = vmatprep.subr.mxu0 0.0
    %314 = vmatpush1.xpose.msra.mxu0 0.0
    %315 = vmatprep.subr.mxu0 0.0
    %316 = vmatpush1.xpose.msra.mxu0 0.0
    %317 = vmatprep.subr.mxu0 0.0
    %318 = vmatpush1.xpose.msra.mxu0 0.0
    %319 = vmatprep.subr.mxu0 0.0
    %320 = vmatpush1.xpose.msra.mxu0 0.0
    %321 = vmatprep.subr.mxu0 0.0
    %322 = vmatpush1.xpose.msra.mxu0 0.0
    %323 = vmatprep.subr.mxu0 0.0
    %324 = vmatpush1.xpose.msra.mxu0 0.0
    %325 = vmatprep.subr.mxu0 0.0
    %326 = vmatpush1.xpose.msra.mxu0 0.0
    %327 = vmatprep.subr.mxu0 0.0
    %328 = vmatpush1.xpose.msra.mxu0 0.0
    %329 = vmatprep.subr.mxu0 0.0
    %330 = vmatpush1.xpose.msra.mxu0 0.0
    %331 = vmatprep.subr.mxu0 0.0
    %332 = vmatpush1.xpose.msra.mxu0 0.0
    %333 = vmatprep.subr.mxu0 0.0
    %334 = vmatpush1.xpose.msra.mxu0 0.0
    %335 = vmatprep.subr.mxu0 0.0
    %336 = vmatpush1.xpose.msra.mxu0 0.0
    %337 = vmatprep.subr.mxu0 0.0
    %338 = vmatpush1.xpose.msra.mxu0 0.0
    %339 = vmatprep.subr.mxu0 0.0
    %340 = vmatpush1.xpose.msra.mxu0 0.0
    %341 = vmatprep.subr.mxu0 0.0
    %342 = vmatpush1.xpose.msra.mxu0 0.0
    %343 = vmatprep.subr.mxu0 0.0
    %344 = vmatpush1.xpose.msra.mxu0 0.0
    %345 = vmatprep.subr.mxu0 0.0
    %346 = vmatpush1.xpose.msra.mxu0 0.0
    %347 = vmatprep.subr.mxu0 0.0
    %348 = vmatpush1.xpose.msra.mxu0 0.0
    %349 = vmatprep.subr.mxu0 0.0
    %350 = vmatpush1.xpose.msra.mxu0 0.0
    %351 = vmatprep.subr.mxu0 0.0
    %352 = vmatpush1.xpose.msra.mxu0 0.0
    %353 = vmatprep.subr.mxu0 0.0
    %354 = vmatpush1.xpose.msra.mxu0 0.0
    %355 = vmatprep.subr.mxu0 0.0
    %356 = vmatpush1.xpose.msra.mxu0 0.0
    %357 = vmatprep.subr.mxu0 0.0
    %358 = vmatpush1.xpose.msra.mxu0 0.0
    %359 = vmatprep.subr.mxu0 0.0
    %360 = vmatpush1.xpose.msra.mxu0 0.0
    %361 = vmatprep.subr.mxu0 0.0
    %362 = vmatpush1.xpose.msra.mxu0 0.0
    %363 = vmatprep.mubr.f32.mxu0 0.0
    %364 = vmatmul.mubr.f32.gmra.mrb[0].mxu0 %v291
    %v365 = vpop.f32.mrb[0].mxu0
    %v366 = vadd.f32 %v289, %v365
    %v367 = vpop.f32.mrb[0].mxu0
    %368 = vdwg.mxu0
    %vm369 = vcmask 122880
    %370 = vst.msk [vmem:[#allocation2] sm:$0x1] %vm369, %v366
    // Predicated region
    $region14: #{tpu_custom_call.1} parent=1 // pred_check
      _
    $region15: #{tpu_custom_call.1} parent=1 // pred_check_branch
      %372 = sbr.rel (0) target = $region17
    $region16: #{tpu_custom_call.1} parent=1 // pred_region
      %s374 = ssub.s32 16, 16
      %375 = vsyncadd [#allocation3], %s374
      %s377 = sshll.u32 [#allocation2], 4
      %s378 = int_to_ptr.vmem [resolvable:$true] %s377
      %380 = dma.vmem_to_hbm [thread:$0]  %s378, 16, %s3, [#allocation3]
    $region17: #{tpu_custom_call.1} parent=1 // pred_fallthru
      _
    // Predicated region
    $region18: #{tpu_custom_call.1} parent=1 // pred_check
      _
    $region19: #{tpu_custom_call.1} parent=1 // pred_check_branch
      %382 = sbr.rel (0) target = $region21
    $region20: #{tpu_custom_call.1} parent=1 // pred_region
      %383 = dma.done [#allocation3], 16
    $region21: #{tpu_custom_call.1} parent=1 // pred_fallthru
      _
    %384 = vsyncpa [#allocation3], 1

</llo_original>
